<compile_context>
chip_gen: v5e
topology: v5e:2x2
jax: 0.10.0
libtpu: 0.0.40
codegen_flags: <defaults>
</compile_context>

<pallas_src>
import functools

import jax
import jax.numpy as jnp
from jax import lax
from jax.experimental import pallas as pl
from jax.experimental.pallas import tpu as pltpu


def _row_sum_max_kernel(x_ref, sum_ref, max_ref, *, block_rows, block_cols,
                        valid_cols, needs_col_mask):
    """Stream one (block_rows, block_cols) tile of the (rows, spatial) view.

    Accumulates per-row partial sums / maxes into lane-dense (block_rows, 128)
    output blocks that stay VMEM-resident across the spatial-reduction grid
    axis (same output block index for every spatial step).
    """
    s = pl.program_id(1)

    @pl.when(s == 0)
    def _():
        sum_ref[...] = jnp.zeros_like(sum_ref)
        max_ref[...] = jnp.full_like(max_ref, -jnp.inf)

    n_chunks = block_cols // 128
    col_base = s * block_cols
    if needs_col_mask:
        # Hoisted out of the chunk loop (JAX does not CSE broadcast_in_dim).
        lane = lax.broadcasted_iota(jnp.int32, (block_rows, 128), 1)

    def chunk_body(i, carry):
        s_acc, m_acc = carry
        start = pl.multiple_of(i * 128, 128)
        c = x_ref[:, pl.ds(start, 128)].astype(jnp.float32)   # (TR, 128)
        s_acc = s_acc + c          # padded columns are zero -> no effect on sum
        if needs_col_mask:
            col = col_base + start + lane
            c = jnp.where(col < valid_cols, c, -jnp.inf)
        m_acc = jnp.maximum(m_acc, c)
        return s_acc, m_acc

    s_fin, m_fin = lax.fori_loop(
        0, n_chunks, chunk_body, (sum_ref[...], max_ref[...]),
        unroll=min(8, n_chunks))
    sum_ref[...] = s_fin
    max_ref[...] = m_fin


def _pick_tile(total, align, cap_elems):
    """Largest multiple of `align` that divides `total` and is <= cap_elems.

    `total` must be a multiple of `align`; always returns at least `align`.
    """
    units_total = total // align
    max_units = max(1, min(units_total, cap_elems // align))
    for k in range(max_units, 0, -1):
        if units_total % k == 0:
            return k * align
    return align


def channel_attention_3d(x, w1, w2, *, block_rows=None, block_cols=None,
                         target_block_bytes=4 * 1024 * 1024):
    """x: (N, C, D, H, W).  w1: (C//ratio, C, 1, 1, 1).  w2: (C, C//ratio, 1, 1, 1)."""
    N, C, D, H, W = x.shape
    hidden = w1.shape[0]
    S = D * H * W
    R = N * C
    itemsize = jnp.dtype(x.dtype).itemsize

    S_pad = -(-S // 128) * 128   # round up to lane multiple
    R_pad = -(-R // 8) * 8       # round up to sublane multiple

    x_flat = x.reshape(R, S)
    if S_pad != S or R_pad != R:
        # Zero padding: zeros are neutral for the sum; padded columns are
        # masked to -inf in-kernel for the max; padded rows are dropped below.
        x_flat = jnp.pad(x_flat, ((0, R_pad - R), (0, S_pad - S)))

    # --- Tile selection: large per-step blocks (amortize per-step overhead),
    # wide contiguous columns (efficient strided DMA), rows capped to keep the
    # in-register (TR, 128) accumulators cheap. ---
    target_elems = max(8 * 128, target_block_bytes // itemsize)
    if block_cols is None:
        block_cols = _pick_tile(S_pad, 128, max(128, target_elems // 8))
    if block_rows is None:
        row_cap = max(8, min(64, target_elems // block_cols))
        block_rows = _pick_tile(R_pad, 8, row_cap)
    assert block_cols % 128 == 0 and S_pad % block_cols == 0
    assert block_rows % 8 == 0 and R_pad % block_rows == 0

    grid = (R_pad // block_rows, S_pad // block_cols)

    kernel = functools.partial(
        _row_sum_max_kernel, block_rows=block_rows, block_cols=block_cols,
        valid_cols=S, needs_col_mask=(S_pad != S))

    psum, pmax = pl.pallas_call(
        kernel,
        out_shape=(jax.ShapeDtypeStruct((R_pad, 128), jnp.float32),
                   jax.ShapeDtypeStruct((R_pad, 128), jnp.float32)),
        grid=grid,
        in_specs=[pl.BlockSpec((block_rows, block_cols), lambda r, s: (r, s))],
        out_specs=(pl.BlockSpec((block_rows, 128), lambda r, s: (r, 0)),
                   pl.BlockSpec((block_rows, 128), lambda r, s: (r, 0))),
        compiler_params=pltpu.CompilerParams(
            dimension_semantics=("parallel", "arbitrary")),
    )(x_flat)

    # Final 128-lane reduce + the tiny fc1 -> ReLU -> fc2 -> sigmoid MLP are
    # hoisted out of the kernel (O(N*C*hidden) work: trivial for XLA).
    sum_rows = jnp.sum(psum, axis=1)[:R].reshape(N, C)
    max_rows = jnp.max(pmax, axis=1)[:R].reshape(N, C)
    avg_rows = sum_rows * (1.0 / S)

    w1r = w1.reshape(hidden, C).astype(jnp.float32)   # fc1 weight
    w2r = w2.reshape(C, hidden).astype(jnp.float32)   # fc2 weight

    def mlp(v):                                        # v: (N, C)
        h = jnp.maximum(v @ w1r.T, 0.0)                # fc1 + ReLU -> (N, hidden)
        return h @ w2r.T                               # fc2        -> (N, C)

    att = jax.nn.sigmoid(mlp(avg_rows) + mlp(max_rows)).astype(x.dtype)
    return att.reshape(N, C, 1, 1, 1)


if __name__ == "__main__":
    key = jax.random.PRNGKey(0)

    def make_case(k, N, C, D, H, W, ratio):
        kx, k1, k2 = jax.random.split(k, 3)
        hidden = max(1, C // ratio)
        x = jax.random.normal(kx, (N, C, D, H, W), dtype=jnp.float32)
        # PyTorch Conv3d default init: uniform(-1/sqrt(fan_in), 1/sqrt(fan_in)).
        b1 = 1.0 / (C ** 0.5)
        w1 = jax.random.uniform(k1, (hidden, C, 1, 1, 1), minval=-b1, maxval=b1,
                                dtype=jnp.float32)
        b2 = 1.0 / (hidden ** 0.5)
        w2 = jax.random.uniform(k2, (C, hidden, 1, 1, 1), minval=-b2, maxval=b2,
                                dtype=jnp.float32)
        return x, w1, w2

    def reference(x, w1, w2):
        hidden, C = w1.shape[0], w1.shape[1]
        avg = jnp.mean(x, axis=(2, 3, 4), keepdims=True)
        mx = jnp.max(x, axis=(2, 3, 4), keepdims=True)
        w1r = w1.reshape(hidden, C)
        w2r = w2.reshape(C, hidden)

        def mlp(v):
            h = jnp.maximum(jnp.einsum("ncdhw,oc->nodhw", v, w1r), 0.0)
            return jnp.einsum("nodhw,co->ncdhw", h, w2r)

        return jax.nn.sigmoid(mlp(avg) + mlp(mx))

    ka, kb = jax.random.split(key)

    # Case 1: lane-aligned volume (S = 2048); explicit small tiles to exercise
    # the (row, spatial-reduction) grid and the resident-accumulator path.
    x, w1, w2 = make_case(ka, N=2, C=32, D=8, H=16, W=16, ratio=16)
    out = jax.block_until_ready(
        channel_attention_3d(x, w1, w2, block_rows=16, block_cols=512))
    ref = reference(x, w1, w2)
    assert out.shape == ref.shape == (2, 32, 1, 1, 1)
    assert jnp.allclose(out, ref, atol=1e-5, rtol=1e-5)

    # Case 2: unaligned spatial size (S = 189 -> padded to 256) and unaligned
    # row count (N*C = 60 -> padded to 64); default auto tiling + in-kernel
    # column masking for the max.
    x, w1, w2 = make_case(kb, N=3, C=20, D=3, H=7, W=9, ratio=16)
    out = jax.block_until_ready(channel_attention_3d(x, w1, w2))
    ref = reference(x, w1, w2)
    assert out.shape == ref.shape == (3, 20, 1, 1, 1)
    assert jnp.allclose(out, ref, atol=1e-5, rtol=1e-5)

    print("KERNEL_OK")
</pallas_src>

<mosaic_0001>
module attributes {stable_mosaic.version = 11 : i64} {
  func.func @_row_sum_max_kernel(%arg0: i32, %arg1: i32, %arg2: memref<16x512xf32, #tpu.memory_space<vmem>>, %arg3: memref<16x128xf32, #tpu.memory_space<vmem>>, %arg4: memref<16x128xf32, #tpu.memory_space<vmem>>) attributes {dimension_semantics = [#tpu.dimension_semantics<parallel>, #tpu.dimension_semantics<arbitrary>], iteration_bounds = array<i64: 4, 4>, scalar_prefetch = 0 : i64, scratch_operands = 0 : i64, tpu.core_type = #tpu.core_type<tc>, window_params = [{transform_indices = @transform_0, window_bounds = array<i64: 16, 512>}, {transform_indices = @transform_1, window_bounds = array<i64: 16, 128>}, {transform_indices = @transform_2, window_bounds = array<i64: 16, 128>}]} {
    %c0_i32 = arith.constant 0 : i32
    %0 = arith.cmpi eq, %arg1, %c0_i32 : i32
    %1 = arith.extui %0 : i1 to i32
    %c0_i32_0 = arith.constant 0 : i32
    %2 = arith.cmpi ne, %1, %c0_i32_0 : i32
    scf.if %2 {
      %cst = arith.constant 0.000000e+00 : f32
      %31 = vector.broadcast %cst : f32 to vector<16x128xf32>
      %c0_16 = arith.constant 0 : index
      %c0_17 = arith.constant 0 : index
      %32 = vector.load %arg3[%c0_16, %c0_17] : memref<16x128xf32, #tpu.memory_space<vmem>>, vector<16x128xf32>
      tpu.vector_store %arg3[%c0_16, %c0_17], %31 {strides = array<i32>} : memref<16x128xf32, #tpu.memory_space<vmem>>, vector<16x128xf32>,
      %cst_18 = arith.constant 0xFF800000 : f32
      %33 = vector.broadcast %cst_18 : f32 to vector<16x128xf32>
      %c0_19 = arith.constant 0 : index
      %c0_20 = arith.constant 0 : index
      %34 = vector.load %arg4[%c0_19, %c0_20] : memref<16x128xf32, #tpu.memory_space<vmem>>, vector<16x128xf32>
      tpu.vector_store %arg4[%c0_19, %c0_20], %33 {strides = array<i32>} : memref<16x128xf32, #tpu.memory_space<vmem>>, vector<16x128xf32>,
    } else {
    }
    %c0 = arith.constant 0 : index
    %c0_1 = arith.constant 0 : index
    %3 = vector.load %arg3[%c0, %c0_1] : memref<16x128xf32, #tpu.memory_space<vmem>>, vector<16x128xf32>
    %c0_2 = arith.constant 0 : index
    %c0_3 = arith.constant 0 : index
    %4 = vector.load %arg4[%c0_2, %c0_3] : memref<16x128xf32, #tpu.memory_space<vmem>>, vector<16x128xf32>
    %c0_i32_4 = arith.constant 0 : i32
    %c128_i32 = arith.constant 128 : i32
    %5 = arith.muli %c0_i32_4, %c128_i32 : i32
    %6 = tpu.assume_multiple %5, 128 : i32
    %c0_5 = arith.constant 0 : index
    %7 = arith.index_cast %6 : i32 to index
    %8 = vector.load %arg2[%c0_5, %7] : memref<16x512xf32, #tpu.memory_space<vmem>>, vector<16x128xf32>
    %9 = arith.addf %3, %8 : vector<16x128xf32>
    %10 = arith.maximumf %4, %8 : vector<16x128xf32>
    %c1_i32 = arith.constant 1 : i32
    %c128_i32_6 = arith.constant 128 : i32
    %11 = arith.muli %c1_i32, %c128_i32_6 : i32
    %12 = tpu.assume_multiple %11, 128 : i32
    %c0_7 = arith.constant 0 : index
    %13 = arith.index_cast %12 : i32 to index
    %14 = vector.load %arg2[%c0_7, %13] : memref<16x512xf32, #tpu.memory_space<vmem>>, vector<16x128xf32>
    %15 = arith.addf %9, %14 : vector<16x128xf32>
    %16 = arith.maximumf %10, %14 : vector<16x128xf32>
    %c2_i32 = arith.constant 2 : i32
    %c128_i32_8 = arith.constant 128 : i32
    %17 = arith.muli %c2_i32, %c128_i32_8 : i32
    %18 = tpu.assume_multiple %17, 128 : i32
    %c0_9 = arith.constant 0 : index
    %19 = arith.index_cast %18 : i32 to index
    %20 = vector.load %arg2[%c0_9, %19] : memref<16x512xf32, #tpu.memory_space<vmem>>, vector<16x128xf32>
    %21 = arith.addf %15, %20 : vector<16x128xf32>
    %22 = arith.maximumf %16, %20 : vector<16x128xf32>
    %c3_i32 = arith.constant 3 : i32
    %c128_i32_10 = arith.constant 128 : i32
    %23 = arith.muli %c3_i32, %c128_i32_10 : i32
    %24 = tpu.assume_multiple %23, 128 : i32
    %c0_11 = arith.constant 0 : index
    %25 = arith.index_cast %24 : i32 to index
    %26 = vector.load %arg2[%c0_11, %25] : memref<16x512xf32, #tpu.memory_space<vmem>>, vector<16x128xf32>
    %27 = arith.addf %21, %26 : vector<16x128xf32>
    %28 = arith.maximumf %22, %26 : vector<16x128xf32>
    %c4_i32 = arith.constant 4 : i32
    %c0_12 = arith.constant 0 : index
    %c0_13 = arith.constant 0 : index
    %29 = vector.load %arg3[%c0_12, %c0_13] : memref<16x128xf32, #tpu.memory_space<vmem>>, vector<16x128xf32>
    tpu.vector_store %arg3[%c0_12, %c0_13], %27 {strides = array<i32>} : memref<16x128xf32, #tpu.memory_space<vmem>>, vector<16x128xf32>,
    %c0_14 = arith.constant 0 : index
    %c0_15 = arith.constant 0 : index
    %30 = vector.load %arg4[%c0_14, %c0_15] : memref<16x128xf32, #tpu.memory_space<vmem>>, vector<16x128xf32>
    tpu.vector_store %arg4[%c0_14, %c0_15], %28 {strides = array<i32>} : memref<16x128xf32, #tpu.memory_space<vmem>>, vector<16x128xf32>,
    return
  }
  func.func @transform_0(%arg0: i32, %arg1: i32) -> (i32, i32) {
    %c0_i32 = arith.constant 0 : i32
    return %arg0, %arg1 : i32, i32
  }
  func.func @transform_1(%arg0: i32, %arg1: i32) -> (i32, i32) {
    %c0_i32 = arith.constant 0 : i32
    %c0_i32_0 = arith.constant 0 : i32
    return %arg0, %c0_i32 : i32, i32
  }
  func.func @transform_2(%arg0: i32, %arg1: i32) -> (i32, i32) {
    %c0_i32 = arith.constant 0 : i32
    %c0_i32_0 = arith.constant 0 : i32
    return %arg0, %c0_i32 : i32, i32
  }
}

</mosaic_0001>

<llo_original>
// kernel: tpu_custom_call.1
$region0: #{tpu_custom_call.1}
  #allocation0 [shape = 'u32[]', space=smem, size = 0x4, offset = 0x4, fixed_abs, tag = 'smem constant byte address 0x4 - core index']
  #allocation1 [shape = 'u32[72,128]{1,0:T(1,128)}', space=vmem, size = 0x9000, scoped, tag = 'internal scratch']
  %s0 = inlined_call_operand.hbm [shape: f32[64,2048], index: 0, kind: input, shape index: {}]
  %s1 = inlined_call_operand.hbm [shape: f32[64,128], index: 1, kind: output, shape index: {0}]
  %s2 = inlined_call_operand.hbm [shape: f32[64,128], index: 2, kind: output, shape index: {1}]
  %3 = xla_tuple %s1, %s2
  %s4 = sld [smem:[#allocation0]]
  $region53: #{tpu_custom_call.1} parent=0
    _
  %s6 = ssub.s32 1, %s4
  %s7 = scalar_select 0, %s6, %s4
  $region1: #{tpu_custom_call.1} parent=0
    #allocation2 [shape = 'u8[65536]{0}', space=vmem, size = 0x10000, scoped, tag = 'input window, operand 0']
    #allocation3 [shape = 's32[2]{0}', space=sflag, size = 0x8, scoped, tag = 'scoped memory for tpu_custom_call.1']
    #allocation4 [shape = 's32[2]{0}', space=sflag, size = 0x8, scoped, tag = 'scoped memory for tpu_custom_call.1']
    #allocation5 [shape = 'u8[16384]{0}', space=vmem, size = 0x4000, scoped, tag = 'output window, operand 0']
    #allocation6 [shape = 'u8[16384]{0}', space=vmem, size = 0x4000, scoped, tag = 'output window, operand 1']
    #allocation7 [shape = 's32[2]{0}', space=sflag, size = 0x8, scoped, tag = 'scoped memory for tpu_custom_call.1']
    %8 = vsyncpa [#allocation3], 0
    %s9 = scalar_lea.sflag [#allocation3], 1
    %10 = vsyncpa %s9, 0
    %11 = vsyncpa [#allocation4], 0
    %s12 = scalar_lea.sflag [#allocation4], 1
    %13 = vsyncpa %s12, 0
    %14 = vsyncpa [#allocation7], 0
    %s15 = scalar_lea.sflag [#allocation7], 1
    %16 = vsyncpa %s15, 0
    loop: start=0, step=1, limit=18
    $region2: #{tpu_custom_call.1} parent=1 // loop_pre_header
      _
    $region3: #{tpu_custom_call.1} parent=1 // loop_header
      %s18 = sphi 0, %s22
      %p19 = scmp.ge.s32.totalorder %s18, 18
      %s25 = sphi 0, %s37
      %s26 = sphi 0, %s33
      %s27 = sphi 0, %s25
      %s28 = sphi 0, %s26
      %s29 = sphi 0, %s27
      %s30 = sphi 0, %s28
      %s42 = sphi 0, %s44
      %s45 = sphi 0, %s42
      %s46 = sphi 0, %s45
      %s62 = sphi 0, %s46
      %s68 = sphi 0, %s70
      %s71 = sphi 0, %s68
      %s72 = sphi 0, %s71
      %s88 = sphi 0, %s72
      %s94 = sphi 0, %s96
      %s97 = sphi 0, %s94
      %s98 = sphi 0, %s97
      %s114 = sphi 0, %s98
    $region4: #{tpu_custom_call.1} parent=1 // loop_header_branch
      %21 = sbr.rel (%p19) target = $region8
    $region5: #{tpu_custom_call.1} parent=1 // loop_body
      %s23 = ssub.s32 %s18, 1
      %s24 = ssub.s32 %s18, 2
      %s31 = sadd.s32 1, %s26
      %p32 = scmp.ge.s32.totalorder %s31, 4
      %s33 = scalar_select %p32, 0, %s31
      %s34 = sadd.s32 1, %s25
      %s35 = scalar_select %p32, %s34, %s25
      %p36 = scmp.ge.s32.totalorder %s35, 4
      %s37 = scalar_select %p36, 0, %s35
      %s38 = ssub.s32 %s25, %s37
      %s39 = ssub.s32 %s26, %s33
      %s40 = sor.u32 %s38, %s39
      %p41 = scmp.eq.s32.totalorder %s40, 0
      %s43 = sadd.s32 %s42, 1
      %s44 = scalar_select %p41, %s42, %s43
      %p47 = pneg %p41
      %p48 = scmp.eq.s32.totalorder %s18, 15
      %p49 = por %p47, %p48
      %p50 = scmp.ne.s32.totalorder %s42, %s45
      %p51 = scmp.eq.s32.totalorder %s18, 0
      %p52 = por %p50, %p51
      %p53 = scmp.ne.s32.totalorder %s42, %s45
      %p54 = scmp.eq.s32.totalorder %s23, 15
      %p55 = por %p53, %p54
      %p56 = scmp.ne.s32.totalorder %s45, %s46
      %p57 = scmp.eq.s32.totalorder %s23, 0
      %p58 = por %p56, %p57
      %p59 = scmp.ne.s32.totalorder %s45, %s46
      %p60 = scmp.eq.s32.totalorder %s24, 15
      %p61 = por %p59, %p60
      %p63 = scmp.ne.s32.totalorder %s46, %s62
      %p64 = scmp.eq.s32.totalorder %s24, 0
      %p65 = por %p63, %p64
      %s66 = ssub.s32 %s25, %s37
      %p67 = scmp.eq.s32.totalorder %s66, 0
      %s69 = sadd.s32 %s68, 1
      %s70 = scalar_select %p67, %s68, %s69
      %p73 = pneg %p67
      %p74 = scmp.eq.s32.totalorder %s18, 15
      %p75 = por %p73, %p74
      %p76 = scmp.ne.s32.totalorder %s68, %s71
      %p77 = scmp.eq.s32.totalorder %s18, 0
      %p78 = por %p76, %p77
      %p79 = scmp.ne.s32.totalorder %s68, %s71
      %p80 = scmp.eq.s32.totalorder %s23, 15
      %p81 = por %p79, %p80
      %p82 = scmp.ne.s32.totalorder %s71, %s72
      %p83 = scmp.eq.s32.totalorder %s23, 0
      %p84 = por %p82, %p83
      %p85 = scmp.ne.s32.totalorder %s71, %s72
      %p86 = scmp.eq.s32.totalorder %s24, 15
      %p87 = por %p85, %p86
      %p89 = scmp.ne.s32.totalorder %s72, %s88
      %p90 = scmp.eq.s32.totalorder %s24, 0
      %p91 = por %p89, %p90
      %s92 = ssub.s32 %s25, %s37
      %p93 = scmp.eq.s32.totalorder %s92, 0
      %s95 = sadd.s32 %s94, 1
      %s96 = scalar_select %p93, %s94, %s95
      %p99 = pneg %p93
      %p100 = scmp.eq.s32.totalorder %s18, 15
      %p101 = por %p99, %p100
      %p102 = scmp.ne.s32.totalorder %s94, %s97
      %p103 = scmp.eq.s32.totalorder %s18, 0
      %p104 = por %p102, %p103
      %p105 = scmp.ne.s32.totalorder %s94, %s97
      %p106 = scmp.eq.s32.totalorder %s23, 15
      %p107 = por %p105, %p106
      %p108 = scmp.ne.s32.totalorder %s97, %s98
      %p109 = scmp.eq.s32.totalorder %s23, 0
      %p110 = por %p108, %p109
      %p111 = scmp.ne.s32.totalorder %s97, %s98
      %p112 = scmp.eq.s32.totalorder %s24, 15
      %p113 = por %p111, %p112
      %p115 = scmp.ne.s32.totalorder %s98, %s114
      %p116 = scmp.eq.s32.totalorder %s24, 0
      %p117 = por %p115, %p116
      %p118 = scmp.le.s32.totalorder 1, %s18
      %p119 = scmp.lt.s32.totalorder %s18, 17
      %p120 = pnand %p118, %p119
      %p121 = pneg %p120
      // Predicated region
      $region9: #{tpu_custom_call.1} parent=5 // pred_check
        _
      $region10: #{tpu_custom_call.1} parent=5 // pred_check_branch
        %123 = sbr.rel (%p120) target = $region12
      $region11: #{tpu_custom_call.1} parent=5 // pred_region
        %s124 = ssub.s32 %s18, 1
      $region12: #{tpu_custom_call.1} parent=5 // pred_fallthru
        _
      %p125 = scmp.lt.s32.totalorder %s18, 16
      // Predicated region
      $region13: #{tpu_custom_call.1} parent=5 // pred_check
        %p126 = pneg %p125
      $region14: #{tpu_custom_call.1} parent=5 // pred_check_branch
        %128 = sbr.rel (%p126) target = $region16
      $region15: #{tpu_custom_call.1} parent=5 // pred_region
        // Predicated region
        $region17: #{tpu_custom_call.1} parent=15 // pred_check
          %p129 = pneg %p52
        $region18: #{tpu_custom_call.1} parent=15 // pred_check_branch
          %131 = sbr.rel (%p129) target = $region20
        $region19: #{tpu_custom_call.1} parent=15 // pred_region
          %s132 = sand.u32 %s42, 1
          %s133 = scalar_lea.sflag [#allocation3], %s132
          %s134 = sand.u32 %s42, 1
          %s135 = smul.addr %s134, 64
          %s136 = scalar_lea.vmem [#allocation2], %s135
          %s137 = smul.u32 2, %s25
          %s138 = smul.u32 4, %s26
          %140 = vsyncadd %s133, 0
          %s141 = smul.addr %s137, 16
          %s142 = sadd.s32 %s138, %s141
          %s143 = smul.addr %s142, 8
          %s144 = scalar_lea.hbm %s0, %s143
          %s145 = sshll.u32 %s144, 4
          %s146 = int_to_ptr.hbm [resolvable:$true] %s145
          %s147 = sshll.u32 %s136, 4
          %s148 = int_to_ptr.vmem [resolvable:$true] %s147
          %153 = dma.hbm_to_vmem [thread:$0]  %s146, 1024, %s148, %s133, 2048, 512, 32
        $region20: #{tpu_custom_call.1} parent=15 // pred_fallthru
          _
      $region16: #{tpu_custom_call.1} parent=5 // pred_fallthru
        _
      %p154 = scmp.le.s32.totalorder 1, %s18
      %p155 = scmp.lt.s32.totalorder %s18, 17
      %p156 = pnand %p154, %p155
      %p157 = pneg %p156
      // Predicated region
      $region21: #{tpu_custom_call.1} parent=5 // pred_check
        _
      $region22: #{tpu_custom_call.1} parent=5 // pred_check_branch
        %159 = sbr.rel (%p156) target = $region24
      $region23: #{tpu_custom_call.1} parent=5 // pred_region
        %s160 = ssub.s32 %s18, 1
        %s161 = sand.u32 %s45, 1
        %s162 = scalar_lea.sflag [#allocation3], %s161
        %s163 = sand.u32 %s45, 1
        %s164 = smul.addr %s163, 64
        %s165 = scalar_lea.vmem [#allocation2], %s164
        // Predicated region
        $region25: #{tpu_custom_call.1} parent=23 // pred_check
          %p166 = pneg %p58
        $region26: #{tpu_custom_call.1} parent=23 // pred_check_branch
          %168 = sbr.rel (%p166) target = $region28
        $region27: #{tpu_custom_call.1} parent=23 // pred_region
          %170 = dma.done %s162, 1024
        $region28: #{tpu_custom_call.1} parent=23 // pred_fallthru
          _
        %s171 = sand.u32 %s45, 1
        %s172 = scalar_lea.sflag [#allocation3], %s171
        %s173 = sand.u32 %s45, 1
        %s174 = smul.addr %s173, 64
        %s175 = scalar_lea.vmem [#allocation2], %s174
        %p176 = pneg %p58
        %p177 = pneg %p55
        %p178 = pneg %p84
        %p179 = pneg %p81
        %s180 = sand.u32 %s71, 1
        %s181 = scalar_lea.sflag [#allocation4], %s180
        %s182 = sand.u32 %s71, 1
        %s183 = smul.addr %s182, 16
        %s184 = scalar_lea.vmem [#allocation5], %s183
        %p185 = pneg %p110
        %p186 = pneg %p107
        %s187 = sand.u32 %s97, 1
        %s188 = scalar_lea.sflag [#allocation7], %s187
        %s189 = sand.u32 %s97, 1
        %s190 = smul.addr %s189, 16
        %s191 = scalar_lea.vmem [#allocation6], %s190
        %s192 = smul.u32 2, %s27
        %s193 = smul.u32 4, %s28
        %s194 = smul.u32 2, %s27
        %s195 = smul.u32 2, %s27
        %p196 = scmp.eq.s32.totalorder %s28, 0
        // Predicated region
        $region29: #{tpu_custom_call.1} parent=23 // pred_check
          %p197 = pneg %p196
        $region30: #{tpu_custom_call.1} parent=23 // pred_check_branch
          %199 = sbr.rel (%p197) target = $region32
        $region31: #{tpu_custom_call.1} parent=23 // pred_region
          %200 = vst [vmem:[%s184] sm:$0xff] 0.0
          %201 = vst [vmem:[%s184 + $0x8] sm:$0xff] 0.0
          %202 = vst [vmem:[%s191] sm:$0xff] -inf
          %203 = vst [vmem:[%s191 + $0x8] sm:$0xff] -inf
        $region32: #{tpu_custom_call.1} parent=23 // pred_fallthru
          _
        %v204 = vld [vmem:[%s184] sm:$0xff]
        %v205 = vld [vmem:[%s184 + $0x8] sm:$0xff]
        %v206 = vld [vmem:[%s191] sm:$0xff]
        %v207 = vld [vmem:[%s191 + $0x8] sm:$0xff]
        %v208 = vld [vmem:[%s165] sm:$0xff]
        %v209 = vld [vmem:[%s165 + $0x20] sm:$0xff]
        %v210 = vadd.f32 %v204, %v208
        %v211 = vadd.f32 %v205, %v209
        %v212 = vmax.f32 %v206, %v208
        %v213 = vmax.f32 %v207, %v209
        %s214 = scalar_lea.vmem %s165, 8 [#allocation2]
        %v215 = vld [vmem:[%s214] sm:$0xff]
        %v216 = vld [vmem:[%s214 + $0x20] sm:$0xff]
        %v217 = vadd.f32 %v210, %v215
        %v218 = vadd.f32 %v211, %v216
        %v219 = vmax.f32 %v212, %v215
        %v220 = vmax.f32 %v213, %v216
        %s221 = scalar_lea.vmem %s165, 16 [#allocation2]
        %v222 = vld [vmem:[%s221] sm:$0xff]
        %v223 = vld [vmem:[%s221 + $0x20] sm:$0xff]
        %v224 = vadd.f32 %v217, %v222
        %v225 = vadd.f32 %v218, %v223
        %v226 = vmax.f32 %v219, %v222
        %v227 = vmax.f32 %v220, %v223
        %s228 = scalar_lea.vmem %s165, 24 [#allocation2]
        %v229 = vld [vmem:[%s228] sm:$0xff]
        %v230 = vld [vmem:[%s228 + $0x20] sm:$0xff]
        %v231 = vadd.f32 %v224, %v229
        %v232 = vadd.f32 %v225, %v230
        %v233 = vmax.f32 %v226, %v229
        %v234 = vmax.f32 %v227, %v230
        %235 = vst [vmem:[%s184] sm:$0xff] %v231
        %236 = vst [vmem:[%s184 + $0x8] sm:$0xff] %v232
        %237 = vst [vmem:[%s191] sm:$0xff] %v233
        %238 = vst [vmem:[%s191 + $0x8] sm:$0xff] %v234
        %s239 = sand.u32 %s71, 1
        %s240 = scalar_lea.sflag [#allocation4], %s239
        %s241 = sand.u32 %s71, 1
        %s242 = smul.addr %s241, 16
        %s243 = scalar_lea.vmem [#allocation5], %s242
        %s244 = sand.u32 %s97, 1
        %s245 = scalar_lea.sflag [#allocation7], %s244
        %s246 = sand.u32 %s97, 1
        %s247 = smul.addr %s246, 16
        %s248 = scalar_lea.vmem [#allocation6], %s247
        // Predicated region
        $region33: #{tpu_custom_call.1} parent=23 // pred_check
          %p249 = pneg %p81
        $region34: #{tpu_custom_call.1} parent=23 // pred_check_branch
          %251 = sbr.rel (%p249) target = $region36
        $region35: #{tpu_custom_call.1} parent=23 // pred_region
          %s252 = smul.u32 2, %s27
          %254 = vsyncadd %s240, 0
          %s255 = smul.addr %s252, 8
          %s256 = scalar_lea.hbm %s1, %s255
          %s257 = sshll.u32 %s243, 4
          %s258 = int_to_ptr.vmem [resolvable:$true] %s257
          %s259 = sshll.u32 %s256, 4
          %s260 = int_to_ptr.hbm [resolvable:$true] %s259
          %265 = dma.vmem_to_hbm [thread:$0]  %s258, 256, %s260, %s240, 128, 128, 8
        $region36: #{tpu_custom_call.1} parent=23 // pred_fallthru
          _
        // Predicated region
        $region37: #{tpu_custom_call.1} parent=23 // pred_check
          %p266 = pneg %p107
        $region38: #{tpu_custom_call.1} parent=23 // pred_check_branch
          %268 = sbr.rel (%p266) target = $region40
        $region39: #{tpu_custom_call.1} parent=23 // pred_region
          %s269 = smul.u32 2, %s27
          %271 = vsyncadd %s245, 0
          %s272 = smul.addr %s269, 8
          %s273 = scalar_lea.hbm %s2, %s272
          %s274 = sshll.u32 %s248, 4
          %s275 = int_to_ptr.vmem [resolvable:$true] %s274
          %s276 = sshll.u32 %s273, 4
          %s277 = int_to_ptr.hbm [resolvable:$true] %s276
          %282 = dma.vmem_to_hbm [thread:$0]  %s275, 256, %s277, %s245, 128, 128, 8
        $region40: #{tpu_custom_call.1} parent=23 // pred_fallthru
          _
      $region24: #{tpu_custom_call.1} parent=5 // pred_fallthru
        _
      %p283 = scmp.le.s32.totalorder 2, %s18
      // Predicated region
      $region41: #{tpu_custom_call.1} parent=5 // pred_check
        %p284 = pneg %p283
      $region42: #{tpu_custom_call.1} parent=5 // pred_check_branch
        %286 = sbr.rel (%p284) target = $region44
      $region43: #{tpu_custom_call.1} parent=5 // pred_region
        %s287 = ssub.s32 %s18, 2
        // Predicated region
        $region45: #{tpu_custom_call.1} parent=43 // pred_check
          %p288 = pneg %p87
        $region46: #{tpu_custom_call.1} parent=43 // pred_check_branch
          %290 = sbr.rel (%p288) target = $region48
        $region47: #{tpu_custom_call.1} parent=43 // pred_region
          %s291 = sand.u32 %s72, 1
          %s292 = scalar_lea.sflag [#allocation4], %s291
          %s293 = sand.u32 %s72, 1
          %s294 = smul.addr %s293, 16
          %s295 = scalar_lea.vmem [#allocation5], %s294
          %297 = dma.done %s292, 256
        $region48: #{tpu_custom_call.1} parent=43 // pred_fallthru
          _
        // Predicated region
        $region49: #{tpu_custom_call.1} parent=43 // pred_check
          %p298 = pneg %p113
        $region50: #{tpu_custom_call.1} parent=43 // pred_check_branch
          %300 = sbr.rel (%p298) target = $region52
        $region51: #{tpu_custom_call.1} parent=43 // pred_region
          %s301 = sand.u32 %s98, 1
          %s302 = scalar_lea.sflag [#allocation7], %s301
          %s303 = sand.u32 %s98, 1
          %s304 = smul.addr %s303, 16
          %s305 = scalar_lea.vmem [#allocation6], %s304
          %307 = dma.done %s302, 256
        $region52: #{tpu_custom_call.1} parent=43 // pred_fallthru
          _
      $region44: #{tpu_custom_call.1} parent=5 // pred_fallthru
        _
    $region6: #{tpu_custom_call.1} parent=1 // loop_footer
      %s22 = sadd.s32 1, %s18
    $region7: #{tpu_custom_call.1} parent=1 // loop_footer_branch
      %17 = sbr.rel target = $region3
    $region8: #{tpu_custom_call.1} parent=1 // loop_exit
      _
    %308 = vsyncpa [#allocation3], 1
    %s309 = scalar_lea.sflag [#allocation3], 1
    %310 = vsyncpa %s309, 1
    %311 = vsyncpa [#allocation4], 1
    %s312 = scalar_lea.sflag [#allocation4], 1
    %313 = vsyncpa %s312, 1
    %314 = vsyncpa [#allocation7], 1
    %s315 = scalar_lea.sflag [#allocation7], 1
    %316 = vsyncpa %s315, 1

</llo_original>
